<compile_context>
chip_gen: v5e
topology: v5e:2x2
jax: 0.10.0
libtpu: 0.0.40
codegen_flags: <defaults>
</compile_context>

<pallas_src>
import functools

import jax
import jax.numpy as jnp
from jax.experimental import pallas as pl
from jax.experimental.pallas import tpu as pltpu

EPS = 1e-8


def _round_up(n, m):
    return (n + m - 1) // m * m


def _ln_scale_shift(s1, s2, count, gamma, beta):
    """GlobLN folded to one per-channel FMA: returns (scale, shift)."""
    inv_n = 1.0 / count
    mean = s1 * inv_n
    var = jnp.maximum(s2 * inv_n - mean * mean, 0.0)   # one-pass variance
    inv = jax.lax.rsqrt(var + EPS)                     # EUP slot (free-ish)
    scale = gamma * inv                                # (H, 1)
    shift = beta - mean * scale                        # (H, 1)
    return scale, shift


def _conv1d_block_kernel(x_ref, w1_ref, b1_ref, a1_ref, g1_ref, be1_ref,
                         wd_ref, bd_ref, a2_ref, g2_ref, be2_ref,
                         wr_ref, br_ref, o_ref,
                         *, kernel_size, padding, dilation, t_in, t_out, w_out):
    x = x_ref[0]                                       # (Cin, W), W % 128 == 0
    H = w1_ref.shape[0]
    W = x.shape[-1]
    a1 = a1_ref[0]                                     # PReLU slopes from SMEM
    a2 = a2_ref[0]

    # Single lane-index row; broadcast everywhere (NOT an (H, W) slab).
    col = jax.lax.broadcasted_iota(jnp.int32, (1, W), 1)

    # ---- in_conv1d: 1x1 conv == (H, Cin) @ (Cin, W) on the MXU, + PReLU ----
    y = jnp.dot(w1_ref[...], x, preferred_element_type=jnp.float32) + b1_ref[...]
    y = jnp.where(y >= 0, y, a1 * y)

    # ---- GlobLN #1: full-slab stats with analytic pad correction ----
    # Padded x columns are exactly zero -> pre-LN y there is PReLU(b1[h]) per
    # row; subtract that contribution instead of a full-slab select.
    c = jnp.where(b1_ref[...] >= 0, b1_ref[...], a1 * b1_ref[...])     # (H, 1)
    n_pad = float(W - t_in)
    s1 = (jnp.sum(y, axis=(0, 1), keepdims=True)
          - n_pad * jnp.sum(c, axis=(0, 1), keepdims=True))
    s2 = (jnp.sum(y * y, axis=(0, 1), keepdims=True)
          - n_pad * jnp.sum(c * c, axis=(0, 1), keepdims=True))
    scale1, shift1 = _ln_scale_shift(s1, s2, float(H * t_in),
                                     g1_ref[...], be1_ref[...])
    # Fold the column mask into the LN output FMA: columns >= t_in become
    # exactly zero, so the depthwise taps below need no per-tap masks (the
    # wrapper guarantees >= `padding` columns of zero slack past t_in).
    y = jnp.where(col < t_in, y * scale1 + shift1, 0.0)

    # ---- depthwise dilated conv: K rolls (XLU) + K FMAs, mask-free ----
    # z[:, t] = sum_k wd[:, k] * y[:, t + k*dilation - padding]
    wd = wd_ref[...]                                   # (H, K)
    z = None
    for k in range(kernel_size):                       # static unroll over K
        sh = (padding - k * dilation) % W
        rolled = pltpu.roll(y, sh, axis=1) if sh else y
        tap = wd[:, k:k + 1] * rolled
        z = tap if z is None else z + tap

    # Work on a lane-dense w_out prefix from here on (static, lane-aligned).
    zc = z[:, :w_out]
    # Bias add fused with zeroing of the columns beyond the real output
    # length, so LN #2 stats need no separate select pass.
    zc = jnp.where(col[:, :w_out] < t_out, zc + bd_ref[...], 0.0)

    # ---- PReLU #2 (zeros stay zero) + GlobLN #2 ----
    zc = jnp.where(zc >= 0, zc, a2 * zc)
    s1 = jnp.sum(zc, axis=(0, 1), keepdims=True)
    s2 = jnp.sum(zc * zc, axis=(0, 1), keepdims=True)
    scale2, shift2 = _ln_scale_shift(s1, s2, float(H * t_out),
                                     g2_ref[...], be2_ref[...])
    zc = zc * scale2 + shift2

    # ---- res_conv: 1x1 conv == (Cin, H) @ (H, w_out) ----
    out = jnp.dot(wr_ref[...], zc, preferred_element_type=jnp.float32) + br_ref[...]
    o_ref[0] = out.astype(o_ref.dtype)


def conv1d_block(x, p, *, kernel_size, padding, dilation):
    B, cin, T = x.shape
    H = p["w1"].shape[0]
    t_out = T + 2 * padding - dilation * (kernel_size - 1)

    # Lane-dense working width with >= `padding` columns of zero slack past T
    # so the roll-based depthwise conv needs no boundary masks.
    W = _round_up(max(T + padding, t_out), 128)
    w_out = _round_up(t_out, 128)
    assert W >= T + padding and W >= w_out >= t_out
    x_pad = x if W == T else jnp.pad(x, ((0, 0), (0, 0), (0, W - T)))

    kern = functools.partial(
        _conv1d_block_kernel, kernel_size=kernel_size, padding=padding,
        dilation=dilation, t_in=T, t_out=t_out, w_out=w_out)

    def vmem_const(shape):
        # Parameter blocks: same block index for every batch step.
        return pl.BlockSpec(shape, lambda b: tuple(0 for _ in shape))

    def smem_scalar():
        # (1,)-shaped scalar parameter: whole array in SMEM, no VMEM tile.
        return pl.BlockSpec(memory_space=pltpu.MemorySpace.SMEM)

    # Resident-set estimate (f32): double-buffered in/out blocks + a handful of
    # (H, W) activation slabs + parameters. Capped at 56 MiB to leave DMA
    # headroom on v7x (64 MiB physical VMEM).
    est = 4 * (2 * cin * W + 2 * cin * w_out + 6 * H * W
               + H * (cin + kernel_size + 8) + cin * (H + 1))
    vmem_limit = int(min(max(est, 32 * 1024 * 1024), 56 * 1024 * 1024))

    # TODO(synk): for production Conv-TasNet sizes (H=512, T~4k) on v7x (64 MiB
    # VMEM) / v5e (16 MiB default scoped limit): tile the time axis with a
    # two-pass GlobLN (+ dilation*(K-1) halo), keep activations in bf16 on
    # v6e/v7x (stats/rsqrt in f32), and add a second parallel grid axis (or
    # block several batch elements per step for tiny T) so v7x's 2nd
    # TensorCore is not idle when B == 1. Toy sizes fit comfortably in f32.
    out = pl.pallas_call(
        kern,
        out_shape=jax.ShapeDtypeStruct((B, cin, w_out), x.dtype),
        grid=(B,),
        in_specs=[
            pl.BlockSpec((1, cin, W), lambda b: (b, 0, 0)),    # x
            vmem_const((H, cin)),  vmem_const((H, 1)),         # w1, b1
            smem_scalar(),                                     # PReLU slope 1
            vmem_const((H, 1)),    vmem_const((H, 1)),         # gamma1, beta1
            vmem_const((H, kernel_size)), vmem_const((H, 1)),  # depthwise w, b
            smem_scalar(),                                     # PReLU slope 2
            vmem_const((H, 1)),    vmem_const((H, 1)),         # gamma2, beta2
            vmem_const((cin, H)),  vmem_const((cin, 1)),       # res conv w, b
        ],
        out_specs=pl.BlockSpec((1, cin, w_out), lambda b: (b, 0, 0)),
        compiler_params=pltpu.CompilerParams(
            dimension_semantics=("parallel",),
            vmem_limit_bytes=vmem_limit),
    )(x_pad, p["w1"], p["b1"], p["a1"], p["g1"], p["be1"],
      p["wd"], p["bd"], p["a2"], p["g2"], p["be2"], p["wr"], p["br"])

    return out[:, :, :t_out]


def ref_forward(x, p, *, kernel_size, padding, dilation):
    """Pure-JAX reference matching the PyTorch forward (two-pass LN stats)."""
    B, cin, T = x.shape
    t_out = T + 2 * padding - dilation * (kernel_size - 1)
    y = jnp.einsum("hc,bct->bht", p["w1"], x, precision="highest") + p["b1"][None]
    y = jnp.where(y >= 0, y, p["a1"][0] * y)
    m = y.mean(axis=(1, 2), keepdims=True)
    v = ((y - m) ** 2).mean(axis=(1, 2), keepdims=True)
    y = p["g1"][None] * ((y - m) / jnp.sqrt(v + EPS)) + p["be1"][None]
    yp = jnp.pad(y, ((0, 0), (0, 0), (padding, padding)))
    z = sum(p["wd"][None, :, k:k + 1] * yp[:, :, k * dilation:k * dilation + t_out]
            for k in range(kernel_size)) + p["bd"][None]
    z = jnp.where(z >= 0, z, p["a2"][0] * z)
    m2 = z.mean(axis=(1, 2), keepdims=True)
    v2 = ((z - m2) ** 2).mean(axis=(1, 2), keepdims=True)
    z = p["g2"][None] * ((z - m2) / jnp.sqrt(v2 + EPS)) + p["be2"][None]
    return jnp.einsum("ch,bht->bct", p["wr"], z, precision="highest") + p["br"][None]


if __name__ == "__main__":
    B, in_chan, hid_chan = 2, 8, 16
    K = 3

    key = jax.random.PRNGKey(0)
    ks = jax.random.split(key, 12)
    p = {
        "w1": 0.1 * jax.random.normal(ks[0], (hid_chan, in_chan), jnp.float32),
        "b1": 0.1 * jax.random.normal(ks[1], (hid_chan, 1), jnp.float32),
        "a1": jnp.full((1,), 0.25, jnp.float32),             # PReLU slope
        "g1": 1.0 + 0.1 * jax.random.normal(ks[2], (hid_chan, 1), jnp.float32),
        "be1": 0.1 * jax.random.normal(ks[3], (hid_chan, 1), jnp.float32),
        "wd": 0.1 * jax.random.normal(ks[4], (hid_chan, K), jnp.float32),
        "bd": 0.1 * jax.random.normal(ks[5], (hid_chan, 1), jnp.float32),
        "a2": jnp.full((1,), 0.25, jnp.float32),
        "g2": 1.0 + 0.1 * jax.random.normal(ks[6], (hid_chan, 1), jnp.float32),
        "be2": 0.1 * jax.random.normal(ks[7], (hid_chan, 1), jnp.float32),
        "wr": 0.1 * jax.random.normal(ks[8], (in_chan, hid_chan), jnp.float32),
        "br": 0.1 * jax.random.normal(ks[9], (in_chan, 1), jnp.float32),
    }
    x_long = jax.random.normal(ks[10], (B, in_chan, 512), jnp.float32)
    x_short = x_long[:, :, :32]

    # Configs exercise: positive/zero/negative roll shifts, dilation, and the
    # w_out < W lane-dense prefix path (third config).
    configs = [
        (x_short, 3, 1, 1),
        (x_short, 3, 2, 2),
        (x_long, 3, 2, 64),
    ]
    for (xc, kernel_size, padding, dilation) in configs:
        out = conv1d_block(xc, p, kernel_size=kernel_size, padding=padding,
                           dilation=dilation)
        out = jax.block_until_ready(out)
        ref = ref_forward(xc, p, kernel_size=kernel_size, padding=padding,
                          dilation=dilation)
        T = xc.shape[-1]
        t_out = T + 2 * padding - dilation * (kernel_size - 1)
        assert out.shape == (B, in_chan, t_out), out.shape
        err = float(jnp.max(jnp.abs(out - ref)))
        assert jnp.allclose(out, ref, atol=2e-4, rtol=2e-4), err

    print("KERNEL_OK")
</pallas_src>

<mosaic_0001>
module attributes {stable_mosaic.version = 11 : i64} {
  func.func @_conv1d_block_kernel(%arg0: i32, %arg1: memref<1x8x128xf32, #tpu.memory_space<vmem>>, %arg2: memref<16x8xf32, #tpu.memory_space<vmem>>, %arg3: memref<16x1xf32, #tpu.memory_space<vmem>>, %arg4: memref<1xf32, #tpu.memory_space<smem>>, %arg5: memref<16x1xf32, #tpu.memory_space<vmem>>, %arg6: memref<16x1xf32, #tpu.memory_space<vmem>>, %arg7: memref<16x3xf32, #tpu.memory_space<vmem>>, %arg8: memref<16x1xf32, #tpu.memory_space<vmem>>, %arg9: memref<1xf32, #tpu.memory_space<smem>>, %arg10: memref<16x1xf32, #tpu.memory_space<vmem>>, %arg11: memref<16x1xf32, #tpu.memory_space<vmem>>, %arg12: memref<8x16xf32, #tpu.memory_space<vmem>>, %arg13: memref<8x1xf32, #tpu.memory_space<vmem>>, %arg14: memref<1x8x128xf32, #tpu.memory_space<vmem>>) attributes {dimension_semantics = [#tpu.dimension_semantics<parallel>], iteration_bounds = array<i64: 2>, scalar_prefetch = 0 : i64, scratch_operands = 0 : i64, tpu.core_type = #tpu.core_type<tc>, window_params = [{transform_indices = @transform_0, window_bounds = array<i64: 1, 8, 128>}, {pipeline_mode = #tpu.pipeline_mode<synchronous>, transform_indices = @transform_1, window_bounds = array<i64: 16, 8>}, {pipeline_mode = #tpu.pipeline_mode<synchronous>, transform_indices = @transform_2, window_bounds = array<i64: 16, 1>}, {transform_indices = @transform_3, window_bounds = array<i64: 1>}, {pipeline_mode = #tpu.pipeline_mode<synchronous>, transform_indices = @transform_4, window_bounds = array<i64: 16, 1>}, {pipeline_mode = #tpu.pipeline_mode<synchronous>, transform_indices = @transform_5, window_bounds = array<i64: 16, 1>}, {pipeline_mode = #tpu.pipeline_mode<synchronous>, transform_indices = @transform_6, window_bounds = array<i64: 16, 3>}, {pipeline_mode = #tpu.pipeline_mode<synchronous>, transform_indices = @transform_7, window_bounds = array<i64: 16, 1>}, {transform_indices = @transform_8, window_bounds = array<i64: 1>}, {pipeline_mode = #tpu.pipeline_mode<synchronous>, transform_indices = @transform_9, window_bounds = array<i64: 16, 1>}, {pipeline_mode = #tpu.pipeline_mode<synchronous>, transform_indices = @transform_10, window_bounds = array<i64: 16, 1>}, {pipeline_mode = #tpu.pipeline_mode<synchronous>, transform_indices = @transform_11, window_bounds = array<i64: 8, 16>}, {pipeline_mode = #tpu.pipeline_mode<synchronous>, transform_indices = @transform_12, window_bounds = array<i64: 8, 1>}, {transform_indices = @transform_13, window_bounds = array<i64: 1, 8, 128>}]} {
    %c0 = arith.constant 0 : index
    %c0_0 = arith.constant 0 : index
    %c0_1 = arith.constant 0 : index
    %0 = vector.load %arg1[%c0, %c0_0, %c0_1] : memref<1x8x128xf32, #tpu.memory_space<vmem>>, vector<1x8x128xf32>
    %1 = vector.shape_cast %0 : vector<1x8x128xf32> to vector<8x128xf32>
    %c0_2 = arith.constant 0 : index
    %2 = memref.load %arg4[%c0_2] : memref<1xf32, #tpu.memory_space<smem>>
    %c0_3 = arith.constant 0 : index
    %3 = memref.load %arg9[%c0_3] : memref<1xf32, #tpu.memory_space<smem>>
    %4 = tpu.iota {dimensions = array<i32: 1>} : vector<1x128xi32>
    %c0_4 = arith.constant 0 : index
    %c0_5 = arith.constant 0 : index
    %5 = vector.load %arg2[%c0_4, %c0_5] : memref<16x8xf32, #tpu.memory_space<vmem>>, vector<16x8xf32>
    %cst = arith.constant dense<0.000000e+00> : vector<16x128xf32>
    %6 = tpu.matmul %5, %1, %cst {dimension_numbers = #tpu.dot_dimension_numbers<[1], [0], [0], [1], [0, 0, 1, 1], [], []>} : vector<16x8xf32>, vector<8x128xf32>, vector<16x128xf32> -> vector<16x128xf32>
    %c0_6 = arith.constant 0 : index
    %c0_7 = arith.constant 0 : index
    %7 = vector.load %arg3[%c0_6, %c0_7] : memref<16x1xf32, #tpu.memory_space<vmem>>, vector<16x1xf32>
    %8 = vector.broadcast %7 : vector<16x1xf32> to vector<16x128xf32>
    %9 = arith.addf %6, %8 : vector<16x128xf32>
    %cst_8 = arith.constant 0.000000e+00 : f32
    %10 = vector.broadcast %cst_8 : f32 to vector<16x128xf32>
    %11 = arith.cmpf oge, %9, %10 : vector<16x128xf32>
    %12 = vector.broadcast %2 : f32 to vector<16x128xf32>
    %13 = arith.mulf %12, %9 : vector<16x128xf32>
    %14 = arith.select %11, %9, %13 : vector<16x128xi1>, vector<16x128xf32>
    %c0_9 = arith.constant 0 : index
    %c0_10 = arith.constant 0 : index
    %15 = vector.load %arg3[%c0_9, %c0_10] : memref<16x1xf32, #tpu.memory_space<vmem>>, vector<16x1xf32>
    %cst_11 = arith.constant 0.000000e+00 : f32
    %16 = vector.broadcast %cst_11 : f32 to vector<16x1xf32>
    %17 = arith.cmpf oge, %15, %16 : vector<16x1xf32>
    %c0_12 = arith.constant 0 : index
    %c0_13 = arith.constant 0 : index
    %18 = vector.load %arg3[%c0_12, %c0_13] : memref<16x1xf32, #tpu.memory_space<vmem>>, vector<16x1xf32>
    %c0_14 = arith.constant 0 : index
    %c0_15 = arith.constant 0 : index
    %19 = vector.load %arg3[%c0_14, %c0_15] : memref<16x1xf32, #tpu.memory_space<vmem>>, vector<16x1xf32>
    %20 = vector.broadcast %2 : f32 to vector<16x1xf32>
    %21 = arith.mulf %20, %19 : vector<16x1xf32>
    %22 = arith.select %17, %18, %21 : vector<16x1xi1>, vector<16x1xf32>
    %23 = vector.shape_cast %14 : vector<16x128xf32> to vector<1x16x128xf32>
    %cst_16 = arith.constant dense<0.000000e+00> : vector<1xf32>
    %24 = vector.multi_reduction <add>, %23, %cst_16 [1, 2] : vector<1x16x128xf32> to vector<1xf32>
    %25 = vector.shape_cast %24 : vector<1xf32> to vector<1x1x1xf32>
    %26 = vector.extract %25[0, 0, 0] : f32 from vector<1x1x1xf32>
    %27 = vector.broadcast %26 : f32 to vector<1x1xf32>
    %28 = vector.shape_cast %22 : vector<16x1xf32> to vector<1x16x1xf32>
    %cst_17 = arith.constant dense<0.000000e+00> : vector<1xf32>
    %29 = vector.multi_reduction <add>, %28, %cst_17 [1, 2] : vector<1x16x1xf32> to vector<1xf32>
    %30 = vector.shape_cast %29 : vector<1xf32> to vector<1x1x1xf32>
    %31 = vector.extract %30[0, 0, 0] : f32 from vector<1x1x1xf32>
    %32 = vector.broadcast %31 : f32 to vector<1x1xf32>
    %cst_18 = arith.constant 9.600000e+01 : f32
    %33 = vector.broadcast %cst_18 : f32 to vector<1x1xf32>
    %34 = arith.mulf %33, %32 : vector<1x1xf32>
    %35 = arith.subf %27, %34 : vector<1x1xf32>
    %36 = arith.mulf %14, %14 : vector<16x128xf32>
    %37 = vector.shape_cast %36 : vector<16x128xf32> to vector<1x16x128xf32>
    %cst_19 = arith.constant dense<0.000000e+00> : vector<1xf32>
    %38 = vector.multi_reduction <add>, %37, %cst_19 [1, 2] : vector<1x16x128xf32> to vector<1xf32>
    %39 = vector.shape_cast %38 : vector<1xf32> to vector<1x1x1xf32>
    %40 = vector.extract %39[0, 0, 0] : f32 from vector<1x1x1xf32>
    %41 = vector.broadcast %40 : f32 to vector<1x1xf32>
    %42 = arith.mulf %22, %22 : vector<16x1xf32>
    %43 = vector.shape_cast %42 : vector<16x1xf32> to vector<1x16x1xf32>
    %cst_20 = arith.constant dense<0.000000e+00> : vector<1xf32>
    %44 = vector.multi_reduction <add>, %43, %cst_20 [1, 2] : vector<1x16x1xf32> to vector<1xf32>
    %45 = vector.shape_cast %44 : vector<1xf32> to vector<1x1x1xf32>
    %46 = vector.extract %45[0, 0, 0] : f32 from vector<1x1x1xf32>
    %47 = vector.broadcast %46 : f32 to vector<1x1xf32>
    %cst_21 = arith.constant 9.600000e+01 : f32
    %48 = vector.broadcast %cst_21 : f32 to vector<1x1xf32>
    %49 = arith.mulf %48, %47 : vector<1x1xf32>
    %50 = arith.subf %41, %49 : vector<1x1xf32>
    %c0_22 = arith.constant 0 : index
    %c0_23 = arith.constant 0 : index
    %51 = vector.load %arg5[%c0_22, %c0_23] : memref<16x1xf32, #tpu.memory_space<vmem>>, vector<16x1xf32>
    %c0_24 = arith.constant 0 : index
    %c0_25 = arith.constant 0 : index
    %52 = vector.load %arg6[%c0_24, %c0_25] : memref<16x1xf32, #tpu.memory_space<vmem>>, vector<16x1xf32>
    %cst_26 = arith.constant 0.001953125 : f32
    %53 = vector.broadcast %cst_26 : f32 to vector<1x1xf32>
    %54 = arith.mulf %35, %53 : vector<1x1xf32>
    %cst_27 = arith.constant 0.001953125 : f32
    %55 = vector.broadcast %cst_27 : f32 to vector<1x1xf32>
    %56 = arith.mulf %50, %55 : vector<1x1xf32>
    %57 = arith.mulf %54, %54 : vector<1x1xf32>
    %58 = arith.subf %56, %57 : vector<1x1xf32>
    %cst_28 = arith.constant 0.000000e+00 : f32
    %59 = vector.broadcast %cst_28 : f32 to vector<1x1xf32>
    %60 = arith.maximumf %58, %59 : vector<1x1xf32>
    %cst_29 = arith.constant 9.99999993E-9 : f32
    %61 = vector.broadcast %cst_29 : f32 to vector<1x1xf32>
    %62 = arith.addf %60, %61 : vector<1x1xf32>
    %63 = math.rsqrt %62 : vector<1x1xf32>
    %64 = vector.broadcast %63 : vector<1x1xf32> to vector<16x1xf32>
    %65 = arith.mulf %51, %64 : vector<16x1xf32>
    %66 = vector.broadcast %54 : vector<1x1xf32> to vector<16x1xf32>
    %67 = arith.mulf %66, %65 : vector<16x1xf32>
    %68 = arith.subf %52, %67 : vector<16x1xf32>
    %c32_i32 = arith.constant 32 : i32
    %69 = vector.broadcast %c32_i32 : i32 to vector<1x128xi32>
    %70 = arith.cmpi slt, %4, %69 : vector<1x128xi32>
    %71 = vector.broadcast %65 : vector<16x1xf32> to vector<16x128xf32>
    %72 = arith.mulf %14, %71 : vector<16x128xf32>
    %73 = vector.broadcast %68 : vector<16x1xf32> to vector<16x128xf32>
    %74 = arith.addf %72, %73 : vector<16x128xf32>
    %cst_30 = arith.constant 0.000000e+00 : f32
    %75 = vector.shape_cast %70 : vector<1x128xi1> to vector<1x128xi1>
    %76 = vector.broadcast %75 : vector<1x128xi1> to vector<16x128xi1>
    %77 = vector.broadcast %cst_30 : f32 to vector<16x128xf32>
    %78 = arith.select %76, %74, %77 : vector<16x128xi1>, vector<16x128xf32>
    %c0_31 = arith.constant 0 : index
    %c0_32 = arith.constant 0 : index
    %79 = vector.load %arg7[%c0_31, %c0_32] : memref<16x3xf32, #tpu.memory_space<vmem>>, vector<16x3xf32>
    %c1_i32 = arith.constant 1 : i32
    %80 = tpu.dynamic_rotate %78 by %c1_i32 dim 1 : vector<16x128xf32>, i32 -> vector<16x128xf32>
    %81 = vector.extract_strided_slice %79 {offsets = [0, 0], sizes = [16, 1], strides = [1, 1]} : vector<16x3xf32> to vector<16x1xf32>
    %82 = vector.broadcast %81 : vector<16x1xf32> to vector<16x128xf32>
    %83 = arith.mulf %82, %80 : vector<16x128xf32>
    %84 = vector.extract_strided_slice %79 {offsets = [0, 1], sizes = [16, 1], strides = [1, 1]} : vector<16x3xf32> to vector<16x1xf32>
    %85 = vector.broadcast %84 : vector<16x1xf32> to vector<16x128xf32>
    %86 = arith.mulf %85, %78 : vector<16x128xf32>
    %87 = arith.addf %83, %86 : vector<16x128xf32>
    %c127_i32 = arith.constant 127 : i32
    %88 = tpu.dynamic_rotate %78 by %c127_i32 dim 1 : vector<16x128xf32>, i32 -> vector<16x128xf32>
    %89 = vector.extract_strided_slice %79 {offsets = [0, 2], sizes = [16, 1], strides = [1, 1]} : vector<16x3xf32> to vector<16x1xf32>
    %90 = vector.broadcast %89 : vector<16x1xf32> to vector<16x128xf32>
    %91 = arith.mulf %90, %88 : vector<16x128xf32>
    %92 = arith.addf %87, %91 : vector<16x128xf32>
    %c32_i32_33 = arith.constant 32 : i32
    %93 = vector.broadcast %c32_i32_33 : i32 to vector<1x128xi32>
    %94 = arith.cmpi slt, %4, %93 : vector<1x128xi32>
    %c0_34 = arith.constant 0 : index
    %c0_35 = arith.constant 0 : index
    %95 = vector.load %arg8[%c0_34, %c0_35] : memref<16x1xf32, #tpu.memory_space<vmem>>, vector<16x1xf32>
    %96 = vector.broadcast %95 : vector<16x1xf32> to vector<16x128xf32>
    %97 = arith.addf %92, %96 : vector<16x128xf32>
    %cst_36 = arith.constant 0.000000e+00 : f32
    %98 = vector.shape_cast %94 : vector<1x128xi1> to vector<1x128xi1>
    %99 = vector.broadcast %98 : vector<1x128xi1> to vector<16x128xi1>
    %100 = vector.broadcast %cst_36 : f32 to vector<16x128xf32>
    %101 = arith.select %99, %97, %100 : vector<16x128xi1>, vector<16x128xf32>
    %cst_37 = arith.constant 0.000000e+00 : f32
    %102 = vector.broadcast %cst_37 : f32 to vector<16x128xf32>
    %103 = arith.cmpf oge, %101, %102 : vector<16x128xf32>
    %104 = vector.broadcast %3 : f32 to vector<16x128xf32>
    %105 = arith.mulf %104, %101 : vector<16x128xf32>
    %106 = arith.select %103, %101, %105 : vector<16x128xi1>, vector<16x128xf32>
    %107 = vector.shape_cast %106 : vector<16x128xf32> to vector<1x16x128xf32>
    %cst_38 = arith.constant dense<0.000000e+00> : vector<1xf32>
    %108 = vector.multi_reduction <add>, %107, %cst_38 [1, 2] : vector<1x16x128xf32> to vector<1xf32>
    %109 = vector.shape_cast %108 : vector<1xf32> to vector<1x1x1xf32>
    %110 = vector.extract %109[0, 0, 0] : f32 from vector<1x1x1xf32>
    %111 = vector.broadcast %110 : f32 to vector<1x1xf32>
    %112 = arith.mulf %106, %106 : vector<16x128xf32>
    %113 = vector.shape_cast %112 : vector<16x128xf32> to vector<1x16x128xf32>
    %cst_39 = arith.constant dense<0.000000e+00> : vector<1xf32>
    %114 = vector.multi_reduction <add>, %113, %cst_39 [1, 2] : vector<1x16x128xf32> to vector<1xf32>
    %115 = vector.shape_cast %114 : vector<1xf32> to vector<1x1x1xf32>
    %116 = vector.extract %115[0, 0, 0] : f32 from vector<1x1x1xf32>
    %117 = vector.broadcast %116 : f32 to vector<1x1xf32>
    %c0_40 = arith.constant 0 : index
    %c0_41 = arith.constant 0 : index
    %118 = vector.load %arg10[%c0_40, %c0_41] : memref<16x1xf32, #tpu.memory_space<vmem>>, vector<16x1xf32>
    %c0_42 = arith.constant 0 : index
    %c0_43 = arith.constant 0 : index
    %119 = vector.load %arg11[%c0_42, %c0_43] : memref<16x1xf32, #tpu.memory_space<vmem>>, vector<16x1xf32>
    %cst_44 = arith.constant 0.001953125 : f32
    %120 = vector.broadcast %cst_44 : f32 to vector<1x1xf32>
    %121 = arith.mulf %111, %120 : vector<1x1xf32>
    %cst_45 = arith.constant 0.001953125 : f32
    %122 = vector.broadcast %cst_45 : f32 to vector<1x1xf32>
    %123 = arith.mulf %117, %122 : vector<1x1xf32>
    %124 = arith.mulf %121, %121 : vector<1x1xf32>
    %125 = arith.subf %123, %124 : vector<1x1xf32>
    %cst_46 = arith.constant 0.000000e+00 : f32
    %126 = vector.broadcast %cst_46 : f32 to vector<1x1xf32>
    %127 = arith.maximumf %125, %126 : vector<1x1xf32>
    %cst_47 = arith.constant 9.99999993E-9 : f32
    %128 = vector.broadcast %cst_47 : f32 to vector<1x1xf32>
    %129 = arith.addf %127, %128 : vector<1x1xf32>
    %130 = math.rsqrt %129 : vector<1x1xf32>
    %131 = vector.broadcast %130 : vector<1x1xf32> to vector<16x1xf32>
    %132 = arith.mulf %118, %131 : vector<16x1xf32>
    %133 = vector.broadcast %121 : vector<1x1xf32> to vector<16x1xf32>
    %134 = arith.mulf %133, %132 : vector<16x1xf32>
    %135 = arith.subf %119, %134 : vector<16x1xf32>
    %136 = vector.broadcast %132 : vector<16x1xf32> to vector<16x128xf32>
    %137 = arith.mulf %106, %136 : vector<16x128xf32>
    %138 = vector.broadcast %135 : vector<16x1xf32> to vector<16x128xf32>
    %139 = arith.addf %137, %138 : vector<16x128xf32>
    %c0_48 = arith.constant 0 : index
    %c0_49 = arith.constant 0 : index
    %140 = vector.load %arg12[%c0_48, %c0_49] : memref<8x16xf32, #tpu.memory_space<vmem>>, vector<8x16xf32>
    %cst_50 = arith.constant dense<0.000000e+00> : vector<8x128xf32>
    %141 = tpu.matmul %140, %139, %cst_50 {dimension_numbers = #tpu.dot_dimension_numbers<[1], [0], [0], [1], [0, 0, 1, 1], [], []>} : vector<8x16xf32>, vector<16x128xf32>, vector<8x128xf32> -> vector<8x128xf32>
    %c0_51 = arith.constant 0 : index
    %c0_52 = arith.constant 0 : index
    %142 = vector.load %arg13[%c0_51, %c0_52] : memref<8x1xf32, #tpu.memory_space<vmem>>, vector<8x1xf32>
    %143 = vector.broadcast %142 : vector<8x1xf32> to vector<8x128xf32>
    %144 = arith.addf %141, %143 : vector<8x128xf32>
    %c0_53 = arith.constant 0 : index
    %c0_54 = arith.constant 0 : index
    %c0_55 = arith.constant 0 : index
    %145 = vector.load %arg14[%c0_53, %c0_54, %c0_55] : memref<1x8x128xf32, #tpu.memory_space<vmem>>, vector<1x8x128xf32>
    %146 = vector.shape_cast %145 : vector<1x8x128xf32> to vector<8x128xf32>
    %147 = vector.shape_cast %144 : vector<8x128xf32> to vector<1x8x128xf32>
    tpu.vector_store %arg14[%c0_53, %c0_54, %c0_55], %147 {strides = array<i32>} : memref<1x8x128xf32, #tpu.memory_space<vmem>>, vector<1x8x128xf32>,
    return
  }
  func.func @transform_0(%arg0: i32) -> (i32, i32, i32) {
    %c0_i32 = arith.constant 0 : i32
    %c0_i32_0 = arith.constant 0 : i32
    %c0_i32_1 = arith.constant 0 : i32
    return %arg0, %c0_i32, %c0_i32_0 : i32, i32, i32
  }
  func.func @transform_1(%arg0: i32) -> (i32, i32) {
    %c0_i32 = arith.constant 0 : i32
    %c0_i32_0 = arith.constant 0 : i32
    %c0_i32_1 = arith.constant 0 : i32
    return %c0_i32, %c0_i32_0 : i32, i32
  }
  func.func @transform_2(%arg0: i32) -> (i32, i32) {
    %c0_i32 = arith.constant 0 : i32
    %c0_i32_0 = arith.constant 0 : i32
    %c0_i32_1 = arith.constant 0 : i32
    return %c0_i32, %c0_i32_0 : i32, i32
  }
  func.func @transform_3(%arg0: i32) -> i32 {
    %c0_i32 = arith.constant 0 : i32
    %c0_i32_0 = arith.constant 0 : i32
    return %c0_i32 : i32
  }
  func.func @transform_4(%arg0: i32) -> (i32, i32) {
    %c0_i32 = arith.constant 0 : i32
    %c0_i32_0 = arith.constant 0 : i32
    %c0_i32_1 = arith.constant 0 : i32
    return %c0_i32, %c0_i32_0 : i32, i32
  }
  func.func @transform_5(%arg0: i32) -> (i32, i32) {
    %c0_i32 = arith.constant 0 : i32
    %c0_i32_0 = arith.constant 0 : i32
    %c0_i32_1 = arith.constant 0 : i32
    return %c0_i32, %c0_i32_0 : i32, i32
  }
  func.func @transform_6(%arg0: i32) -> (i32, i32) {
    %c0_i32 = arith.constant 0 : i32
    %c0_i32_0 = arith.constant 0 : i32
    %c0_i32_1 = arith.constant 0 : i32
    return %c0_i32, %c0_i32_0 : i32, i32
  }
  func.func @transform_7(%arg0: i32) -> (i32, i32) {
    %c0_i32 = arith.constant 0 : i32
    %c0_i32_0 = arith.constant 0 : i32
    %c0_i32_1 = arith.constant 0 : i32
    return %c0_i32, %c0_i32_0 : i32, i32
  }
  func.func @transform_8(%arg0: i32) -> i32 {
    %c0_i32 = arith.constant 0 : i32
    %c0_i32_0 = arith.constant 0 : i32
    return %c0_i32 : i32
  }
  func.func @transform_9(%arg0: i32) -> (i32, i32) {
    %c0_i32 = arith.constant 0 : i32
    %c0_i32_0 = arith.constant 0 : i32
    %c0_i32_1 = arith.constant 0 : i32
    return %c0_i32, %c0_i32_0 : i32, i32
  }
  func.func @transform_10(%arg0: i32) -> (i32, i32) {
    %c0_i32 = arith.constant 0 : i32
    %c0_i32_0 = arith.constant 0 : i32
    %c0_i32_1 = arith.constant 0 : i32
    return %c0_i32, %c0_i32_0 : i32, i32
  }
  func.func @transform_11(%arg0: i32) -> (i32, i32) {
    %c0_i32 = arith.constant 0 : i32
    %c0_i32_0 = arith.constant 0 : i32
    %c0_i32_1 = arith.constant 0 : i32
    return %c0_i32, %c0_i32_0 : i32, i32
  }
  func.func @transform_12(%arg0: i32) -> (i32, i32) {
    %c0_i32 = arith.constant 0 : i32
    %c0_i32_0 = arith.constant 0 : i32
    %c0_i32_1 = arith.constant 0 : i32
    return %c0_i32, %c0_i32_0 : i32, i32
  }
  func.func @transform_13(%arg0: i32) -> (i32, i32, i32) {
    %c0_i32 = arith.constant 0 : i32
    %c0_i32_0 = arith.constant 0 : i32
    %c0_i32_1 = arith.constant 0 : i32
    return %arg0, %c0_i32, %c0_i32_0 : i32, i32, i32
  }
}

</mosaic_0001>

<llo_original>
// kernel: tpu_custom_call.1
$region0: #{tpu_custom_call.1}
  #allocation0 [shape = 'u32[]', space=smem, size = 0x4, offset = 0x4, fixed_abs, tag = 'smem constant byte address 0x4 - core index']
  #allocation1 [shape = 'u32[72,128]{1,0:T(1,128)}', space=vmem, size = 0x9000, scoped, tag = 'internal scratch']
  #allocation2 [shape = 'f32[1]{0:T(128)S(6)}', space=smem, size = 0x200, scoped, tag = 'scoped memory for tpu_custom_call.1']
  #allocation3 [shape = 'f32[1]{0:T(128)S(6)}', space=smem, size = 0x200, scoped, tag = 'scoped memory for tpu_custom_call.1']
  %s0 = inlined_call_operand.vmem [shape: f32[2,8,128], index: 0, kind: input, shape index: {}]
  %s1 = inlined_call_operand.vmem [shape: f32[16,8], index: 1, kind: input, shape index: {}]
  %s2 = inlined_call_operand.vmem [shape: f32[16,1], index: 2, kind: input, shape index: {}]
  %s3 = inlined_call_operand.<no memory space> [shape: f32[1], index: 3, kind: input, shape index: {}]
  %s4 = inlined_call_operand.vmem [shape: f32[16,1], index: 4, kind: input, shape index: {}]
  %s5 = inlined_call_operand.vmem [shape: f32[16,1], index: 5, kind: input, shape index: {}]
  %s6 = inlined_call_operand.vmem [shape: f32[16,3], index: 6, kind: input, shape index: {}]
  %s7 = inlined_call_operand.vmem [shape: f32[16,1], index: 7, kind: input, shape index: {}]
  %s8 = inlined_call_operand.<no memory space> [shape: f32[1], index: 8, kind: input, shape index: {}]
  %s9 = inlined_call_operand.vmem [shape: f32[16,1], index: 9, kind: input, shape index: {}]
  %s10 = inlined_call_operand.vmem [shape: f32[16,1], index: 10, kind: input, shape index: {}]
  %s11 = inlined_call_operand.vmem [shape: f32[8,16], index: 11, kind: input, shape index: {}]
  %s12 = inlined_call_operand.vmem [shape: f32[8,1], index: 12, kind: input, shape index: {}]
  %s13 = inlined_call_operand.hbm [shape: f32[2,8,128], index: 13, kind: output, shape index: {}]
  %s14 = sld [smem:[#allocation0]]
  $region85: #{tpu_custom_call.1} parent=0
    _
  %s16 = ssub.s32 1, %s14
  %s17 = scalar_select 0, %s16, %s14
  %18 = sst [smem:[#allocation2]] %s3
  %19 = sst [smem:[#allocation3]] %s8
  $region1: #{tpu_custom_call.1} parent=0
    #allocation4 [shape = 'u8[8192]{0}', space=vmem, size = 0x2000, scoped, tag = 'output window, operand 0']
    #allocation5 [shape = 's32[2]{0}', space=sflag, size = 0x8, scoped, tag = 'scoped memory for tpu_custom_call.1']
    %20 = vsyncpa [#allocation5], 0
    %s21 = scalar_lea.sflag [#allocation5], 1
    %22 = vsyncpa %s21, 0
    loop: start=0, step=1, limit=4
    $region2: #{tpu_custom_call.1} parent=1 // loop_pre_header
      _
    $region3: #{tpu_custom_call.1} parent=1 // loop_header
      %s24 = sphi 0, %s28
      %p25 = scmp.ge.s32.totalorder %s24, 4
      %s34 = sphi 0, %s36
      %s37 = sphi 0, %s34
      %s38 = sphi 0, %s37
      %s54 = sphi 0, %s38
      %s58 = sphi 0, %s58
      %s60 = sphi 0, %s58
      %s61 = sphi 0, %s60
      %s75 = sphi 0, %s61
      %s79 = sphi 0, %s79
      %s81 = sphi 0, %s79
      %s82 = sphi 0, %s81
      %s96 = sphi 0, %s82
      %s100 = sphi 0, %s100
      %s102 = sphi 0, %s100
      %s103 = sphi 0, %s102
      %s117 = sphi 0, %s103
      %s121 = sphi 0, %s121
      %s123 = sphi 0, %s121
      %s124 = sphi 0, %s123
      %s138 = sphi 0, %s124
      %s142 = sphi 0, %s142
      %s144 = sphi 0, %s142
      %s145 = sphi 0, %s144
      %s159 = sphi 0, %s145
      %s163 = sphi 0, %s163
      %s165 = sphi 0, %s163
      %s166 = sphi 0, %s165
      %s180 = sphi 0, %s166
      %s184 = sphi 0, %s184
      %s186 = sphi 0, %s184
      %s187 = sphi 0, %s186
      %s201 = sphi 0, %s187
      %s205 = sphi 0, %s205
      %s207 = sphi 0, %s205
      %s208 = sphi 0, %s207
      %s222 = sphi 0, %s208
      %s226 = sphi 0, %s226
      %s228 = sphi 0, %s226
      %s229 = sphi 0, %s228
      %s243 = sphi 0, %s229
      %s247 = sphi 0, %s247
      %s249 = sphi 0, %s247
      %s250 = sphi 0, %s249
      %s264 = sphi 0, %s250
      %s268 = sphi 0, %s268
      %s270 = sphi 0, %s268
      %s271 = sphi 0, %s270
      %s285 = sphi 0, %s271
      %s289 = sphi 0, %s289
      %s291 = sphi 0, %s289
      %s292 = sphi 0, %s291
      %s306 = sphi 0, %s292
      %s312 = sphi 0, %s314
      %s315 = sphi 0, %s312
      %s316 = sphi 0, %s315
      %s332 = sphi 0, %s316
    $region4: #{tpu_custom_call.1} parent=1 // loop_header_branch
      %27 = sbr.rel (%p25) target = $region8
    $region5: #{tpu_custom_call.1} parent=1 // loop_body
      %s29 = ssub.s32 %s24, 1
      %s30 = ssub.s32 %s24, 2
      %s31 = sadd.s32 %s24, 1
      %s32 = ssub.s32 %s24, %s31
      %p33 = scmp.eq.s32.totalorder %s32, 0
      %s35 = sadd.s32 %s34, 1
      %s36 = scalar_select %p33, %s34, %s35
      %p39 = pneg %p33
      %p40 = scmp.eq.s32.totalorder %s24, 1
      %p41 = por %p39, %p40
      %p42 = scmp.ne.s32.totalorder %s34, %s37
      %p43 = scmp.eq.s32.totalorder %s24, 0
      %p44 = por %p42, %p43
      %p45 = scmp.ne.s32.totalorder %s34, %s37
      %p46 = scmp.eq.s32.totalorder %s29, 1
      %p47 = por %p45, %p46
      %p48 = scmp.ne.s32.totalorder %s37, %s38
      %p49 = scmp.eq.s32.totalorder %s29, 0
      %p50 = por %p48, %p49
      %p51 = scmp.ne.s32.totalorder %s37, %s38
      %p52 = scmp.eq.s32.totalorder %s30, 1
      %p53 = por %p51, %p52
      %p55 = scmp.ne.s32.totalorder %s38, %s54
      %p56 = scmp.eq.s32.totalorder %s30, 0
      %p57 = por %p55, %p56
      %s59 = sadd.s32 %s58, 1
      %p62 = scmp.eq.s32.totalorder %s24, 1
      %p63 = scmp.ne.s32.totalorder %s58, %s60
      %p64 = scmp.eq.s32.totalorder %s24, 0
      %p65 = por %p63, %p64
      %p66 = scmp.ne.s32.totalorder %s58, %s60
      %p67 = scmp.eq.s32.totalorder %s29, 1
      %p68 = por %p66, %p67
      %p69 = scmp.ne.s32.totalorder %s60, %s61
      %p70 = scmp.eq.s32.totalorder %s29, 0
      %p71 = por %p69, %p70
      %p72 = scmp.ne.s32.totalorder %s60, %s61
      %p73 = scmp.eq.s32.totalorder %s30, 1
      %p74 = por %p72, %p73
      %p76 = scmp.ne.s32.totalorder %s61, %s75
      %p77 = scmp.eq.s32.totalorder %s30, 0
      %p78 = por %p76, %p77
      %s80 = sadd.s32 %s79, 1
      %p83 = scmp.eq.s32.totalorder %s24, 1
      %p84 = scmp.ne.s32.totalorder %s79, %s81
      %p85 = scmp.eq.s32.totalorder %s24, 0
      %p86 = por %p84, %p85
      %p87 = scmp.ne.s32.totalorder %s79, %s81
      %p88 = scmp.eq.s32.totalorder %s29, 1
      %p89 = por %p87, %p88
      %p90 = scmp.ne.s32.totalorder %s81, %s82
      %p91 = scmp.eq.s32.totalorder %s29, 0
      %p92 = por %p90, %p91
      %p93 = scmp.ne.s32.totalorder %s81, %s82
      %p94 = scmp.eq.s32.totalorder %s30, 1
      %p95 = por %p93, %p94
      %p97 = scmp.ne.s32.totalorder %s82, %s96
      %p98 = scmp.eq.s32.totalorder %s30, 0
      %p99 = por %p97, %p98
      %s101 = sadd.s32 %s100, 1
      %p104 = scmp.eq.s32.totalorder %s24, 1
      %p105 = scmp.ne.s32.totalorder %s100, %s102
      %p106 = scmp.eq.s32.totalorder %s24, 0
      %p107 = por %p105, %p106
      %p108 = scmp.ne.s32.totalorder %s100, %s102
      %p109 = scmp.eq.s32.totalorder %s29, 1
      %p110 = por %p108, %p109
      %p111 = scmp.ne.s32.totalorder %s102, %s103
      %p112 = scmp.eq.s32.totalorder %s29, 0
      %p113 = por %p111, %p112
      %p114 = scmp.ne.s32.totalorder %s102, %s103
      %p115 = scmp.eq.s32.totalorder %s30, 1
      %p116 = por %p114, %p115
      %p118 = scmp.ne.s32.totalorder %s103, %s117
      %p119 = scmp.eq.s32.totalorder %s30, 0
      %p120 = por %p118, %p119
      %s122 = sadd.s32 %s121, 1
      %p125 = scmp.eq.s32.totalorder %s24, 1
      %p126 = scmp.ne.s32.totalorder %s121, %s123
      %p127 = scmp.eq.s32.totalorder %s24, 0
      %p128 = por %p126, %p127
      %p129 = scmp.ne.s32.totalorder %s121, %s123
      %p130 = scmp.eq.s32.totalorder %s29, 1
      %p131 = por %p129, %p130
      %p132 = scmp.ne.s32.totalorder %s123, %s124
      %p133 = scmp.eq.s32.totalorder %s29, 0
      %p134 = por %p132, %p133
      %p135 = scmp.ne.s32.totalorder %s123, %s124
      %p136 = scmp.eq.s32.totalorder %s30, 1
      %p137 = por %p135, %p136
      %p139 = scmp.ne.s32.totalorder %s124, %s138
      %p140 = scmp.eq.s32.totalorder %s30, 0
      %p141 = por %p139, %p140
      %s143 = sadd.s32 %s142, 1
      %p146 = scmp.eq.s32.totalorder %s24, 1
      %p147 = scmp.ne.s32.totalorder %s142, %s144
      %p148 = scmp.eq.s32.totalorder %s24, 0
      %p149 = por %p147, %p148
      %p150 = scmp.ne.s32.totalorder %s142, %s144
      %p151 = scmp.eq.s32.totalorder %s29, 1
      %p152 = por %p150, %p151
      %p153 = scmp.ne.s32.totalorder %s144, %s145
      %p154 = scmp.eq.s32.totalorder %s29, 0
      %p155 = por %p153, %p154
      %p156 = scmp.ne.s32.totalorder %s144, %s145
      %p157 = scmp.eq.s32.totalorder %s30, 1
      %p158 = por %p156, %p157
      %p160 = scmp.ne.s32.totalorder %s145, %s159
      %p161 = scmp.eq.s32.totalorder %s30, 0
      %p162 = por %p160, %p161
      %s164 = sadd.s32 %s163, 1
      %p167 = scmp.eq.s32.totalorder %s24, 1
      %p168 = scmp.ne.s32.totalorder %s163, %s165
      %p169 = scmp.eq.s32.totalorder %s24, 0
      %p170 = por %p168, %p169
      %p171 = scmp.ne.s32.totalorder %s163, %s165
      %p172 = scmp.eq.s32.totalorder %s29, 1
      %p173 = por %p171, %p172
      %p174 = scmp.ne.s32.totalorder %s165, %s166
      %p175 = scmp.eq.s32.totalorder %s29, 0
      %p176 = por %p174, %p175
      %p177 = scmp.ne.s32.totalorder %s165, %s166
      %p178 = scmp.eq.s32.totalorder %s30, 1
      %p179 = por %p177, %p178
      %p181 = scmp.ne.s32.totalorder %s166, %s180
      %p182 = scmp.eq.s32.totalorder %s30, 0
      %p183 = por %p181, %p182
      %s185 = sadd.s32 %s184, 1
      %p188 = scmp.eq.s32.totalorder %s24, 1
      %p189 = scmp.ne.s32.totalorder %s184, %s186
      %p190 = scmp.eq.s32.totalorder %s24, 0
      %p191 = por %p189, %p190
      %p192 = scmp.ne.s32.totalorder %s184, %s186
      %p193 = scmp.eq.s32.totalorder %s29, 1
      %p194 = por %p192, %p193
      %p195 = scmp.ne.s32.totalorder %s186, %s187
      %p196 = scmp.eq.s32.totalorder %s29, 0
      %p197 = por %p195, %p196
      %p198 = scmp.ne.s32.totalorder %s186, %s187
      %p199 = scmp.eq.s32.totalorder %s30, 1
      %p200 = por %p198, %p199
      %p202 = scmp.ne.s32.totalorder %s187, %s201
      %p203 = scmp.eq.s32.totalorder %s30, 0
      %p204 = por %p202, %p203
      %s206 = sadd.s32 %s205, 1
      %p209 = scmp.eq.s32.totalorder %s24, 1
      %p210 = scmp.ne.s32.totalorder %s205, %s207
      %p211 = scmp.eq.s32.totalorder %s24, 0
      %p212 = por %p210, %p211
      %p213 = scmp.ne.s32.totalorder %s205, %s207
      %p214 = scmp.eq.s32.totalorder %s29, 1
      %p215 = por %p213, %p214
      %p216 = scmp.ne.s32.totalorder %s207, %s208
      %p217 = scmp.eq.s32.totalorder %s29, 0
      %p218 = por %p216, %p217
      %p219 = scmp.ne.s32.totalorder %s207, %s208
      %p220 = scmp.eq.s32.totalorder %s30, 1
      %p221 = por %p219, %p220
      %p223 = scmp.ne.s32.totalorder %s208, %s222
      %p224 = scmp.eq.s32.totalorder %s30, 0
      %p225 = por %p223, %p224
      %s227 = sadd.s32 %s226, 1
      %p230 = scmp.eq.s32.totalorder %s24, 1
      %p231 = scmp.ne.s32.totalorder %s226, %s228
      %p232 = scmp.eq.s32.totalorder %s24, 0
      %p233 = por %p231, %p232
      %p234 = scmp.ne.s32.totalorder %s226, %s228
      %p235 = scmp.eq.s32.totalorder %s29, 1
      %p236 = por %p234, %p235
      %p237 = scmp.ne.s32.totalorder %s228, %s229
      %p238 = scmp.eq.s32.totalorder %s29, 0
      %p239 = por %p237, %p238
      %p240 = scmp.ne.s32.totalorder %s228, %s229
      %p241 = scmp.eq.s32.totalorder %s30, 1
      %p242 = por %p240, %p241
      %p244 = scmp.ne.s32.totalorder %s229, %s243
      %p245 = scmp.eq.s32.totalorder %s30, 0
      %p246 = por %p244, %p245
      %s248 = sadd.s32 %s247, 1
      %p251 = scmp.eq.s32.totalorder %s24, 1
      %p252 = scmp.ne.s32.totalorder %s247, %s249
      %p253 = scmp.eq.s32.totalorder %s24, 0
      %p254 = por %p252, %p253
      %p255 = scmp.ne.s32.totalorder %s247, %s249
      %p256 = scmp.eq.s32.totalorder %s29, 1
      %p257 = por %p255, %p256
      %p258 = scmp.ne.s32.totalorder %s249, %s250
      %p259 = scmp.eq.s32.totalorder %s29, 0
      %p260 = por %p258, %p259
      %p261 = scmp.ne.s32.totalorder %s249, %s250
      %p262 = scmp.eq.s32.totalorder %s30, 1
      %p263 = por %p261, %p262
      %p265 = scmp.ne.s32.totalorder %s250, %s264
      %p266 = scmp.eq.s32.totalorder %s30, 0
      %p267 = por %p265, %p266
      %s269 = sadd.s32 %s268, 1
      %p272 = scmp.eq.s32.totalorder %s24, 1
      %p273 = scmp.ne.s32.totalorder %s268, %s270
      %p274 = scmp.eq.s32.totalorder %s24, 0
      %p275 = por %p273, %p274
      %p276 = scmp.ne.s32.totalorder %s268, %s270
      %p277 = scmp.eq.s32.totalorder %s29, 1
      %p278 = por %p276, %p277
      %p279 = scmp.ne.s32.totalorder %s270, %s271
      %p280 = scmp.eq.s32.totalorder %s29, 0
      %p281 = por %p279, %p280
      %p282 = scmp.ne.s32.totalorder %s270, %s271
      %p283 = scmp.eq.s32.totalorder %s30, 1
      %p284 = por %p282, %p283
      %p286 = scmp.ne.s32.totalorder %s271, %s285
      %p287 = scmp.eq.s32.totalorder %s30, 0
      %p288 = por %p286, %p287
      %s290 = sadd.s32 %s289, 1
      %p293 = scmp.eq.s32.totalorder %s24, 1
      %p294 = scmp.ne.s32.totalorder %s289, %s291
      %p295 = scmp.eq.s32.totalorder %s24, 0
      %p296 = por %p294, %p295
      %p297 = scmp.ne.s32.totalorder %s289, %s291
      %p298 = scmp.eq.s32.totalorder %s29, 1
      %p299 = por %p297, %p298
      %p300 = scmp.ne.s32.totalorder %s291, %s292
      %p301 = scmp.eq.s32.totalorder %s29, 0
      %p302 = por %p300, %p301
      %p303 = scmp.ne.s32.totalorder %s291, %s292
      %p304 = scmp.eq.s32.totalorder %s30, 1
      %p305 = por %p303, %p304
      %p307 = scmp.ne.s32.totalorder %s292, %s306
      %p308 = scmp.eq.s32.totalorder %s30, 0
      %p309 = por %p307, %p308
      %s310 = ssub.s32 %s24, %s31
      %p311 = scmp.eq.s32.totalorder %s310, 0
      %s313 = sadd.s32 %s312, 1
      %s314 = scalar_select %p311, %s312, %s313
      %p317 = pneg %p311
      %p318 = scmp.eq.s32.totalorder %s24, 1
      %p319 = por %p317, %p318
      %p320 = scmp.ne.s32.totalorder %s312, %s315
      %p321 = scmp.eq.s32.totalorder %s24, 0
      %p322 = por %p320, %p321
      %p323 = scmp.ne.s32.totalorder %s312, %s315
      %p324 = scmp.eq.s32.totalorder %s29, 1
      %p325 = por %p323, %p324
      %p326 = scmp.ne.s32.totalorder %s315, %s316
      %p327 = scmp.eq.s32.totalorder %s29, 0
      %p328 = por %p326, %p327
      %p329 = scmp.ne.s32.totalorder %s315, %s316
      %p330 = scmp.eq.s32.totalorder %s30, 1
      %p331 = por %p329, %p330
      %p333 = scmp.ne.s32.totalorder %s316, %s332
      %p334 = scmp.eq.s32.totalorder %s30, 0
      %p335 = por %p333, %p334
      %p336 = scmp.le.s32.totalorder 1, %s24
      %p337 = scmp.lt.s32.totalorder %s24, 3
      %p338 = pnand %p336, %p337
      %p339 = pneg %p338
      // Predicated region
      $region9: #{tpu_custom_call.1} parent=5 // pred_check
        _
      $region10: #{tpu_custom_call.1} parent=5 // pred_check_branch
        %341 = sbr.rel (%p338) target = $region12
      $region11: #{tpu_custom_call.1} parent=5 // pred_region
        %s342 = ssub.s32 %s24, 1
        // Predicated region
        $region13: #{tpu_custom_call.1} parent=11 // pred_check
          %p343 = pneg %p71
        $region14: #{tpu_custom_call.1} parent=11 // pred_check_branch
          %345 = sbr.rel (%p343) target = $region16
        $region15: #{tpu_custom_call.1} parent=11 // pred_region
          _
        $region16: #{tpu_custom_call.1} parent=11 // pred_fallthru
          _
        // Predicated region
        $region17: #{tpu_custom_call.1} parent=11 // pred_check
          %p346 = pneg %p92
        $region18: #{tpu_custom_call.1} parent=11 // pred_check_branch
          %348 = sbr.rel (%p346) target = $region20
        $region19: #{tpu_custom_call.1} parent=11 // pred_region
          _
        $region20: #{tpu_custom_call.1} parent=11 // pred_fallthru
          _
        // Predicated region
        $region21: #{tpu_custom_call.1} parent=11 // pred_check
          %p349 = pneg %p113
        $region22: #{tpu_custom_call.1} parent=11 // pred_check_branch
          %351 = sbr.rel (%p349) target = $region24
        $region23: #{tpu_custom_call.1} parent=11 // pred_region
          _
        $region24: #{tpu_custom_call.1} parent=11 // pred_fallthru
          _
        // Predicated region
        $region25: #{tpu_custom_call.1} parent=11 // pred_check
          %p352 = pneg %p134
        $region26: #{tpu_custom_call.1} parent=11 // pred_check_branch
          %354 = sbr.rel (%p352) target = $region28
        $region27: #{tpu_custom_call.1} parent=11 // pred_region
          _
        $region28: #{tpu_custom_call.1} parent=11 // pred_fallthru
          _
        // Predicated region
        $region29: #{tpu_custom_call.1} parent=11 // pred_check
          %p355 = pneg %p155
        $region30: #{tpu_custom_call.1} parent=11 // pred_check_branch
          %357 = sbr.rel (%p355) target = $region32
        $region31: #{tpu_custom_call.1} parent=11 // pred_region
          _
        $region32: #{tpu_custom_call.1} parent=11 // pred_fallthru
          _
        // Predicated region
        $region33: #{tpu_custom_call.1} parent=11 // pred_check
          %p358 = pneg %p176
        $region34: #{tpu_custom_call.1} parent=11 // pred_check_branch
          %360 = sbr.rel (%p358) target = $region36
        $region35: #{tpu_custom_call.1} parent=11 // pred_region
          _
        $region36: #{tpu_custom_call.1} parent=11 // pred_fallthru
          _
        // Predicated region
        $region37: #{tpu_custom_call.1} parent=11 // pred_check
          %p361 = pneg %p197
        $region38: #{tpu_custom_call.1} parent=11 // pred_check_branch
          %363 = sbr.rel (%p361) target = $region40
        $region39: #{tpu_custom_call.1} parent=11 // pred_region
          _
        $region40: #{tpu_custom_call.1} parent=11 // pred_fallthru
          _
        // Predicated region
        $region41: #{tpu_custom_call.1} parent=11 // pred_check
          %p364 = pneg %p218
        $region42: #{tpu_custom_call.1} parent=11 // pred_check_branch
          %366 = sbr.rel (%p364) target = $region44
        $region43: #{tpu_custom_call.1} parent=11 // pred_region
          _
        $region44: #{tpu_custom_call.1} parent=11 // pred_fallthru
          _
        // Predicated region
        $region45: #{tpu_custom_call.1} parent=11 // pred_check
          %p367 = pneg %p239
        $region46: #{tpu_custom_call.1} parent=11 // pred_check_branch
          %369 = sbr.rel (%p367) target = $region48
        $region47: #{tpu_custom_call.1} parent=11 // pred_region
          _
        $region48: #{tpu_custom_call.1} parent=11 // pred_fallthru
          _
        // Predicated region
        $region49: #{tpu_custom_call.1} parent=11 // pred_check
          %p370 = pneg %p260
        $region50: #{tpu_custom_call.1} parent=11 // pred_check_branch
          %372 = sbr.rel (%p370) target = $region52
        $region51: #{tpu_custom_call.1} parent=11 // pred_region
          _
        $region52: #{tpu_custom_call.1} parent=11 // pred_fallthru
          _
        // Predicated region
        $region53: #{tpu_custom_call.1} parent=11 // pred_check
          %p373 = pneg %p281
        $region54: #{tpu_custom_call.1} parent=11 // pred_check_branch
          %375 = sbr.rel (%p373) target = $region56
        $region55: #{tpu_custom_call.1} parent=11 // pred_region
          _
        $region56: #{tpu_custom_call.1} parent=11 // pred_fallthru
          _
        // Predicated region
        $region57: #{tpu_custom_call.1} parent=11 // pred_check
          %p376 = pneg %p302
        $region58: #{tpu_custom_call.1} parent=11 // pred_check_branch
          %378 = sbr.rel (%p376) target = $region60
        $region59: #{tpu_custom_call.1} parent=11 // pred_region
          _
        $region60: #{tpu_custom_call.1} parent=11 // pred_fallthru
          _
      $region12: #{tpu_custom_call.1} parent=5 // pred_fallthru
        _
      %p379 = scmp.lt.s32.totalorder %s24, 2
      // Predicated region
      $region61: #{tpu_custom_call.1} parent=5 // pred_check
        %p380 = pneg %p379
      $region62: #{tpu_custom_call.1} parent=5 // pred_check_branch
        %382 = sbr.rel (%p380) target = $region64
      $region63: #{tpu_custom_call.1} parent=5 // pred_region
        // Predicated region
        $region65: #{tpu_custom_call.1} parent=63 // pred_check
          %p383 = pneg %p44
        $region66: #{tpu_custom_call.1} parent=63 // pred_check_branch
          %385 = sbr.rel (%p383) target = $region68
        $region67: #{tpu_custom_call.1} parent=63 // pred_region
          %p386 = scmp.lt.s32.totalorder %s24, 1
          %s387 = scalar_select %p386, %s24, 1
          %s388 = smul.addr %s387, 8
          %s389 = scalar_lea.vmem %s0, %s388
        $region68: #{tpu_custom_call.1} parent=63 // pred_fallthru
          _
      $region64: #{tpu_custom_call.1} parent=5 // pred_fallthru
        _
      %p390 = scmp.le.s32.totalorder 1, %s24
      %p391 = scmp.lt.s32.totalorder %s24, 3
      %p392 = pnand %p390, %p391
      %p393 = pneg %p392
      // Predicated region
      $region69: #{tpu_custom_call.1} parent=5 // pred_check
        _
      $region70: #{tpu_custom_call.1} parent=5 // pred_check_branch
        %395 = sbr.rel (%p392) target = $region72
      $region71: #{tpu_custom_call.1} parent=5 // pred_region
        %s396 = ssub.s32 %s24, 1
        %p397 = scmp.lt.s32.totalorder %s29, 1
        %s398 = scalar_select %p397, %s29, 1
        %s399 = smul.addr %s398, 8
        %s400 = scalar_lea.vmem %s0, %s399
        %p401 = pneg %p50
        %p402 = pneg %p47
        %p403 = pneg %p71
        %p404 = pneg %p68
        %p405 = pneg %p92
        %p406 = pneg %p89
        %p407 = pneg %p113
        %p408 = pneg %p110
        %p409 = pneg %p134
        %p410 = pneg %p131
        %p411 = pneg %p155
        %p412 = pneg %p152
        %p413 = pneg %p176
        %p414 = pneg %p173
        %p415 = pneg %p197
        %p416 = pneg %p194
        %p417 = pneg %p218
        %p418 = pneg %p215
        %p419 = pneg %p239
        %p420 = pneg %p236
        %p421 = pneg %p260
        %p422 = pneg %p257
        %p423 = pneg %p281
        %p424 = pneg %p278
        %p425 = pneg %p302
        %p426 = pneg %p299
        %p427 = pneg %p328
        %p428 = pneg %p325
        %s429 = sand.u32 %s315, 1
        %s430 = scalar_lea.sflag [#allocation5], %s429
        %s431 = sand.u32 %s315, 1
        %s432 = smul.addr %s431, 8
        %s433 = scalar_lea.vmem [#allocation4], %s432
        %p434 = scmp.lt.s32.totalorder %s29, 1
        %s435 = scalar_select %p434, %s29, 1
        %s436 = smul.addr %s435, 8
        %s437 = scalar_lea.vmem %s0, %s436
        %v438 = vld [vmem:[%s437] sm:$0xff]
        %s439 = sld [smem:[#allocation2]]
        %s440 = sld [smem:[#allocation3]]
        %v441 = vlaneseq
        %v442 = vand.u32 %v441, 127
        %v443 = vld [vmem:[%s1] sm:$0xff]
        %v444 = vld [vmem:[%s1 + $0x8] sm:$0xff]
        %v445 = vld [vmem:[%s2] sm:$0xff]
        %v446 = vld [vmem:[%s2 + $0x8] sm:$0xff]
        %448 = vset.pattern.permute.xlu0 0
        %449 = vperm.xlu0 %448, %v445
        %v450 = vpop.permute.xlu0 %449
        %453 = vset.pattern.permute.xlu0 0
        %454 = vperm.xlu0 %453, %v446
        %v455 = vpop.permute.xlu0 %454
        %vm457 = vcmask 64512
        %v459 = vsel %vm457, %v443, 0
        %v462 = vsel %vm457, %v444, 0
        %464 = vmatpush.msra.mxu0 0.0
        %465 = vmatpush.msra.mxu0 0.0
        %466 = vmatpush.msra.mxu0 0.0
        %467 = vmatpush.msra.mxu0 0.0
        %468 = vmatpush.msra.mxu0 0.0
        %469 = vmatpush.msra.mxu0 0.0
        %470 = vmatpush.msra.mxu0 0.0
        %471 = vmatpush.msra.mxu0 0.0
        %472 = vmatpush.msra.mxu0 0.0
        %473 = vmatpush.msra.mxu0 0.0
        %474 = vmatpush.msra.mxu0 0.0
        %475 = vmatpush.msra.mxu0 0.0
        %476 = vmatpush.msra.mxu0 0.0
        %477 = vmatpush.msra.mxu0 0.0
        %478 = vmatpush.msra.mxu0 0.0
        %479 = vmatpush.msra.mxu0 %v438
        %480 = vmatmul.f32.gmra.mxu0 %v459
        %v481 = vpop.f32.mrf.mxu0
        %v482 = vadd.f32 %v450, %v481
        %483 = vmatmul.f32.gmra.mxu0 %v462
        %v484 = vpop.f32.mrf.mxu0
        %v485 = vadd.f32 %v455, %v484
        %486 = vdwg.mxu0
        %vm487 = vcmp.ge.f32.partialorder %v482, 0.0
        %vm488 = vcmp.ge.f32.partialorder %v485, 0.0
        %v489 = vstv %s439
        %v490 = vmul.f32 %v489, %v482
        %v491 = vmul.f32 %v489, %v485
        %v492 = vsel %vm487, %v482, %v490
        %v493 = vsel %vm488, %v485, %v491
        %vm494 = vcmp.ge.f32.partialorder %v445, 0.0
        %vm495 = vcmp.ge.f32.partialorder %v446, 0.0
        %v496 = vmul.f32 %v489, %v445
        %v497 = vmul.f32 %v489, %v446
        %v498 = vsel %vm494, %v445, %v496
        %v499 = vsel %vm495, %v446, %v497
        %v500 = vadd.f32 %v492, %v493
        %501 = vadd.xlane.f32.xlu0 %v500
        %v502 = vpop.xlane.xlu0 %501
        %v503 = vrot.slane %v502, 4
        %v504 = vadd.f32 %v502, %v503
        %v505 = vrot.slane %v504, 2
        %v506 = vadd.f32 %v504, %v505
        %v507 = vrot.slane %v506, 1
        %v508 = vadd.f32 %v506, %v507
        %s509 = vtos %v508
        %v510 = vstv %s509
        %vm511 = vcmask 7168
        %v512 = vsel %vm511, %v498, 0.0
        %v513 = vsel %vm511, %v499, 0.0
        %v514 = vadd.f32 %v512, %v513
        %515 = vadd.xlane.f32.xlu0 %v514
        %v516 = vpop.xlane.xlu0 %515
        %v517 = vrot.slane %v516, 4
        %v518 = vadd.f32 %v516, %v517
        %v519 = vrot.slane %v518, 2
        %v520 = vadd.f32 %v518, %v519
        %v521 = vrot.slane %v520, 1
        %v522 = vadd.f32 %v520, %v521
        %s523 = vtos %v522
        %v524 = vstv %s523
        %v525 = vmul.f32 %v524, 96.0
        %v526 = vsub.f32 %v510, %v525
        %v527 = vmul.f32 %v492, %v492
        %v528 = vmul.f32 %v493, %v493
        %v529 = vadd.f32 %v527, %v528
        %530 = vadd.xlane.f32.xlu0 %v529
        %v531 = vpop.xlane.xlu0 %530
        %v532 = vrot.slane %v531, 4
        %v533 = vadd.f32 %v531, %v532
        %v534 = vrot.slane %v533, 2
        %v535 = vadd.f32 %v533, %v534
        %v536 = vrot.slane %v535, 1
        %v537 = vadd.f32 %v535, %v536
        %s538 = vtos %v537
        %v539 = vstv %s538
        %v540 = vmul.f32 %v498, %v498
        %v541 = vmul.f32 %v499, %v499
        %v542 = vsel %vm511, %v540, 0.0
        %v543 = vsel %vm511, %v541, 0.0
        %v544 = vadd.f32 %v542, %v543
        %545 = vadd.xlane.f32.xlu0 %v544
        %v546 = vpop.xlane.xlu0 %545
        %v547 = vrot.slane %v546, 4
        %v548 = vadd.f32 %v546, %v547
        %v549 = vrot.slane %v548, 2
        %v550 = vadd.f32 %v548, %v549
        %v551 = vrot.slane %v550, 1
        %v552 = vadd.f32 %v550, %v551
        %s553 = vtos %v552
        %v554 = vstv %s553
        %v555 = vmul.f32 %v554, 96.0
        %v556 = vsub.f32 %v539, %v555
        %v557 = vld [vmem:[%s4] sm:$0xff]
        %v558 = vld [vmem:[%s4 + $0x8] sm:$0xff]
        %v559 = vld [vmem:[%s5] sm:$0xff]
        %v560 = vld [vmem:[%s5 + $0x8] sm:$0xff]
        %v561 = vmul.f32 %v526, 0.001953125
        %v562 = vmul.f32 %v556, 0.001953125
        %v563 = vmul.f32 %v561, %v561
        %v564 = vsub.f32 %v562, %v563
        %v565 = vmax.f32 %v564, 0.0
        %v566 = vadd.f32 %v565, 1e-08
        %v567 = vrsqrt.pop %v566
        %v568 = vmul.f32 %v567, %v566
        %v569 = vmul.f32 %v568, %v567
        %v570 = vmul.f32 0.5, %v569
        %v571 = vsub.f32 1.5, %v570
        %v572 = vmul.f32 %v567, %v571
        %vm573 = vweird.f32 %v566
        %vm574 = vweird.f32 %v567
        %vm575 = vmor %vm573, %vm574
        %v576 = vsel %vm575, %v567, %v572
        %v577 = vmul.f32 %v557, %v576
        %v578 = vmul.f32 %v558, %v576
        %v579 = vmul.f32 %v561, %v577
        %v580 = vmul.f32 %v561, %v578
        %v581 = vsub.f32 %v559, %v579
        %v582 = vsub.f32 %v560, %v580
        %vm583 = vcmp.lt.s32.totalorder %v442, 32
        %585 = vset.pattern.permute.xlu0 0
        %586 = vperm.xlu0 %585, %v577
        %v587 = vpop.permute.xlu0 %586
        %590 = vset.pattern.permute.xlu0 0
        %591 = vperm.xlu0 %590, %v578
        %v592 = vpop.permute.xlu0 %591
        %v594 = vmul.f32 %v492, %v587
        %v595 = vmul.f32 %v493, %v592
        %597 = vset.pattern.permute.xlu0 0
        %598 = vperm.xlu0 %597, %v581
        %v599 = vpop.permute.xlu0 %598
        %602 = vset.pattern.permute.xlu0 0
        %603 = vperm.xlu0 %602, %v582
        %v604 = vpop.permute.xlu0 %603
        %v606 = vadd.f32 %v594, %v599
        %v607 = vadd.f32 %v595, %v604
        %v608 = vsel %vm583, 1, 0
        %vm609 = vcmp.eq.s32.totalorder %v608, 1
        %v610 = vsel %vm609, %v606, 0.0
        %v611 = vsel %vm609, %v607, 0.0
        %v612 = vld [vmem:[%s6] sm:$0xff]
        %v613 = vld [vmem:[%s6 + $0x8] sm:$0xff]
        %614 = vrot.lane.b32.xlu0 %v610, 1
        %v615 = vpop.permute.xlu0 %614
        %616 = vrot.lane.b32.xlu0 %v611, 1
        %v617 = vpop.permute.xlu0 %616
        %619 = vset.pattern.permute.xlu0 0
        %620 = vperm.xlu0 %619, %v612
        %v621 = vpop.permute.xlu0 %620
        %624 = vset.pattern.permute.xlu0 0
        %625 = vperm.xlu0 %624, %v613
        %v626 = vpop.permute.xlu0 %625
        %v628 = vmul.f32 %v621, %v615
        %v629 = vmul.f32 %v626, %v617
        %630 = vset.pattern.permute.xlu0 1
        %631 = vperm.xlu0 %630, %v612
        %v632 = vpop.permute.xlu0 %631
        %634 = vset.pattern.permute.xlu0 1
        %635 = vperm.xlu0 %634, %v613
        %v636 = vpop.permute.xlu0 %635
        %v638 = vmul.f32 %v632, %v610
        %v639 = vmul.f32 %v636, %v611
        %v640 = vadd.f32 %v628, %v638
        %v641 = vadd.f32 %v629, %v639
        %642 = vrot.lane.b32.xlu0 %v610, 127
        %v643 = vpop.permute.xlu0 %642
        %644 = vrot.lane.b32.xlu0 %v611, 127
        %v645 = vpop.permute.xlu0 %644
        %646 = vset.pattern.permute.xlu0 2
        %647 = vperm.xlu0 %646, %v612
        %v648 = vpop.permute.xlu0 %647
        %650 = vset.pattern.permute.xlu0 2
        %651 = vperm.xlu0 %650, %v613
        %v652 = vpop.permute.xlu0 %651
        %v654 = vmul.f32 %v648, %v643
        %v655 = vmul.f32 %v652, %v645
        %v656 = vadd.f32 %v640, %v654
        %v657 = vadd.f32 %v641, %v655
        %v658 = vld [vmem:[%s7] sm:$0xff]
        %v659 = vld [vmem:[%s7 + $0x8] sm:$0xff]
        %661 = vset.pattern.permute.xlu0 0
        %662 = vperm.xlu0 %661, %v658
        %v663 = vpop.permute.xlu0 %662
        %666 = vset.pattern.permute.xlu0 0
        %667 = vperm.xlu0 %666, %v659
        %v668 = vpop.permute.xlu0 %667
        %v670 = vadd.f32 %v656, %v663
        %v671 = vadd.f32 %v657, %v668
        %v672 = vsel %vm609, %v670, 0.0
        %v673 = vsel %vm609, %v671, 0.0
        %vm674 = vcmp.ge.f32.partialorder %v672, 0.0
        %vm675 = vcmp.ge.f32.partialorder %v673, 0.0
        %v676 = vstv %s440
        %v677 = vmul.f32 %v676, %v672
        %v678 = vmul.f32 %v676, %v673
        %v679 = vsel %vm674, %v672, %v677
        %v680 = vsel %vm675, %v673, %v678
        %v681 = vadd.f32 %v679, %v680
        %682 = vadd.xlane.f32.xlu0 %v681
        %v683 = vpop.xlane.xlu0 %682
        %v684 = vrot.slane %v683, 4
        %v685 = vadd.f32 %v683, %v684
        %v686 = vrot.slane %v685, 2
        %v687 = vadd.f32 %v685, %v686
        %v688 = vrot.slane %v687, 1
        %v689 = vadd.f32 %v687, %v688
        %s690 = vtos %v689
        %v691 = vstv %s690
        %v692 = vmul.f32 %v679, %v679
        %v693 = vmul.f32 %v680, %v680
        %v694 = vadd.f32 %v692, %v693
        %695 = vadd.xlane.f32.xlu0 %v694
        %v696 = vpop.xlane.xlu0 %695
        %v697 = vrot.slane %v696, 4
        %v698 = vadd.f32 %v696, %v697
        %v699 = vrot.slane %v698, 2
        %v700 = vadd.f32 %v698, %v699
        %v701 = vrot.slane %v700, 1
        %v702 = vadd.f32 %v700, %v701
        %s703 = vtos %v702
        %v704 = vstv %s703
        %v705 = vld [vmem:[%s9] sm:$0xff]
        %v706 = vld [vmem:[%s9 + $0x8] sm:$0xff]
        %v707 = vld [vmem:[%s10] sm:$0xff]
        %v708 = vld [vmem:[%s10 + $0x8] sm:$0xff]
        %v709 = vmul.f32 %v691, 0.001953125
        %v710 = vmul.f32 %v704, 0.001953125
        %v711 = vmul.f32 %v709, %v709
        %v712 = vsub.f32 %v710, %v711
        %v713 = vmax.f32 %v712, 0.0
        %v714 = vadd.f32 %v713, 1e-08
        %v715 = vrsqrt.pop %v714
        %v716 = vmul.f32 %v715, %v714
        %v717 = vmul.f32 %v716, %v715
        %v718 = vmul.f32 0.5, %v717
        %v719 = vsub.f32 1.5, %v718
        %v720 = vmul.f32 %v715, %v719
        %vm721 = vweird.f32 %v714
        %vm722 = vweird.f32 %v715
        %vm723 = vmor %vm721, %vm722
        %v724 = vsel %vm723, %v715, %v720
        %v725 = vmul.f32 %v705, %v724
        %v726 = vmul.f32 %v706, %v724
        %v727 = vmul.f32 %v709, %v725
        %v728 = vmul.f32 %v709, %v726
        %v729 = vsub.f32 %v707, %v727
        %v730 = vsub.f32 %v708, %v728
        %732 = vset.pattern.permute.xlu0 0
        %733 = vperm.xlu0 %732, %v725
        %v734 = vpop.permute.xlu0 %733
        %737 = vset.pattern.permute.xlu0 0
        %738 = vperm.xlu0 %737, %v726
        %v739 = vpop.permute.xlu0 %738
        %v741 = vmul.f32 %v679, %v734
        %v742 = vmul.f32 %v680, %v739
        %744 = vset.pattern.permute.xlu0 0
        %745 = vperm.xlu0 %744, %v729
        %v746 = vpop.permute.xlu0 %745
        %749 = vset.pattern.permute.xlu0 0
        %750 = vperm.xlu0 %749, %v730
        %v751 = vpop.permute.xlu0 %750
        %v753 = vadd.f32 %v741, %v746
        %v754 = vadd.f32 %v742, %v751
        %v755 = vld [vmem:[%s11] sm:$0xff]
        %v756 = vld [vmem:[%s12] sm:$0xff]
        %758 = vset.pattern.permute.xlu0 0
        %759 = vperm.xlu0 %758, %v756
        %v760 = vpop.permute.xlu0 %759
        %vm762 = vcmask 130048
        %v764 = vsel %vm762, %v755, 0
        %766 = vmatpush.msra.mxu0 0.0
        %767 = vmatpush.msra.mxu0 0.0
        %768 = vmatpush.msra.mxu0 0.0
        %769 = vmatpush.msra.mxu0 0.0
        %770 = vmatpush.msra.mxu0 0.0
        %771 = vmatpush.msra.mxu0 0.0
        %772 = vmatpush.msra.mxu0 0.0
        %773 = vmatpush.msra.mxu0 0.0
        %774 = vmatpush.msra.mxu0 0.0
        %775 = vmatpush.msra.mxu0 0.0
        %776 = vmatpush.msra.mxu0 0.0
        %777 = vmatpush.msra.mxu0 0.0
        %778 = vmatpush.msra.mxu0 0.0
        %779 = vmatpush.msra.mxu0 0.0
        %780 = vmatpush.msra.mxu0 %v754
        %781 = vmatpush.msra.mxu0 %v753
        %782 = vmatmul.f32.gmra.mxu0 %v764
        %v783 = vpop.f32.mrf.mxu0
        %v784 = vadd.f32 %v760, %v783
        %785 = vdwg.mxu0
        %786 = vst [vmem:[%s433] sm:$0xff] %v784
        %s787 = sand.u32 %s315, 1
        %s788 = scalar_lea.sflag [#allocation5], %s787
        %s789 = sand.u32 %s315, 1
        %s790 = smul.addr %s789, 8
        %s791 = scalar_lea.vmem [#allocation4], %s790
        // Predicated region
        $region73: #{tpu_custom_call.1} parent=71 // pred_check
          %p792 = pneg %p325
        $region74: #{tpu_custom_call.1} parent=71 // pred_check_branch
          %794 = sbr.rel (%p792) target = $region76
        $region75: #{tpu_custom_call.1} parent=71 // pred_region
          %796 = vsyncadd %s788, 0
          %s797 = smul.addr %s29, 8
          %s798 = scalar_lea.hbm %s13, %s797
          %s800 = sshll.u32 %s791, 4
          %s801 = int_to_ptr.vmem [resolvable:$true] %s800
          %s802 = sshll.u32 %s798, 4
          %s803 = int_to_ptr.hbm [resolvable:$true] %s802
          %805 = dma.vmem_to_hbm [thread:$0]  %s801, 128, %s803, %s788
        $region76: #{tpu_custom_call.1} parent=71 // pred_fallthru
          _
      $region72: #{tpu_custom_call.1} parent=5 // pred_fallthru
        _
      %p806 = scmp.le.s32.totalorder 2, %s24
      // Predicated region
      $region77: #{tpu_custom_call.1} parent=5 // pred_check
        %p807 = pneg %p806
      $region78: #{tpu_custom_call.1} parent=5 // pred_check_branch
        %809 = sbr.rel (%p807) target = $region80
      $region79: #{tpu_custom_call.1} parent=5 // pred_region
        %s810 = ssub.s32 %s24, 2
        // Predicated region
        $region81: #{tpu_custom_call.1} parent=79 // pred_check
          %p811 = pneg %p331
        $region82: #{tpu_custom_call.1} parent=79 // pred_check_branch
          %813 = sbr.rel (%p811) target = $region84
        $region83: #{tpu_custom_call.1} parent=79 // pred_region
          %s814 = sand.u32 %s316, 1
          %s815 = scalar_lea.sflag [#allocation5], %s814
          %s816 = sand.u32 %s316, 1
          %s817 = smul.addr %s816, 8
          %s818 = scalar_lea.vmem [#allocation4], %s817
          %820 = dma.done %s815, 128
        $region84: #{tpu_custom_call.1} parent=79 // pred_fallthru
          _
      $region80: #{tpu_custom_call.1} parent=5 // pred_fallthru
        _
    $region6: #{tpu_custom_call.1} parent=1 // loop_footer
      %s28 = sadd.s32 1, %s24
    $region7: #{tpu_custom_call.1} parent=1 // loop_footer_branch
      %23 = sbr.rel target = $region3
    $region8: #{tpu_custom_call.1} parent=1 // loop_exit
      _
    %821 = vsyncpa [#allocation5], 1
    %s822 = scalar_lea.sflag [#allocation5], 1
    %823 = vsyncpa %s822, 1

</llo_original>
